<compile_context>
chip_gen: v7x
topology: tpu7x:2x2x1
jax: 0.10.0
libtpu: 0.0.40
codegen_flags: <defaults>
</compile_context>

<pallas_src>
import jax
import jax.numpy as jnp
from jax.experimental import pallas as pl
from jax.experimental.pallas import tpu as pltpu

HIDDEN = 768       # fixed by the module (nn.Linear(768, 768), nn.Linear(768, 1))
OUT_LANES = 8      # compact output row width (column 0 holds the score)
MAX_TILE_B = 512   # cap on rows per grid step
XLA_BATCH_CUTOFF = 64  # below this, a plain fused XLA dot beats kernel launch cost


def _scorer_kernel(cls_ref, w_ref, b_ref, score_ref):
    # cls_ref:   (tile_b, H)  f32 — contiguous CLS rows for this tile.
    # w_ref:     (1, H)       f32 — folded weight row, VMEM-resident across grid.
    # b_ref:     (1,)         f32 — folded bias, SMEM scalar.
    # score_ref: (tile_b, OUT_LANES) f32 — score broadcast across 8 lanes.
    #
    # Folded scorer: Linear(768->768) ∘ Dropout(p=0) ∘ Linear(768->1) collapses
    # to one matvec; done as VPU multiply + lane reduce (avoids the N=1 MXU
    # shape and the padded (768,1) weight layout).
    prod = cls_ref[...] * w_ref[...]                          # (tile_b, H)   VPU
    s = jnp.sum(prod, axis=-1, keepdims=True) + b_ref[0]      # (tile_b, 1)   XLU reduce
    score_ref[...] = jnp.broadcast_to(s, score_ref.shape).astype(score_ref.dtype)


def fold_scorer_params(w1, b1, w2, b2):
    """One-time algebraic fold of the two Linears (exact for p=0 dropout)."""
    hi = jax.lax.Precision.HIGHEST
    w_eff = jnp.dot(w1, w2, precision=hi).T        # (1, H)
    b_eff = jnp.dot(b1, w2, precision=hi) + b2     # (1,)
    return w_eff, b_eff


def _round_up(x, m):
    return ((x + m - 1) // m) * m


def _pick_tile(B):
    """Choose (tile_b, grid_b): short grid, >=2 steps when B is large enough
    so v7x's two TensorCores both get work; capped tile so very large B still
    pipelines; never degrades to tiny tiles / huge grids for awkward B."""
    if B <= 16:
        return B, 1                      # single block; block shape == full dims
    tile_b = min(MAX_TILE_B, _round_up(pl.cdiv(B, 2), 8))
    grid_b = pl.cdiv(B, tile_b)
    return tile_b, grid_b


def score_regression_forward(last_hidden_state, w1, b1, w2, b2, *, force_pallas=False):
    """Pallas implementation of score_regression.forward (post-backbone part).

    Args:
      last_hidden_state: (B, S, H) float32 — output of the pretrained model.
      w1: (H, H), b1: (H,), w2: (H, 1), b2: (1,) — scorer parameters
          (weights stored transposed as [in, out] vs. torch's [out, in]).
      force_pallas: run the Pallas kernel even for tiny batches (testing).

    Returns:
      (score, cls_feature): shapes (B, 1) and (B, H).
    """
    B, S, H = last_hidden_state.shape
    assert H == HIDDEN

    # cls_feature is a pure pass-through: plain XLA slice.  The same
    # contiguous (B, H) tensor feeds the kernel (dedups with this slice and
    # makes the kernel input DMA dense).
    cls_feature = last_hidden_state[:, 0, :]

    # In deployment the folded params would be cached once at model load.
    w_eff, b_eff = fold_scorer_params(w1, b1, w2, b2)       # (1, H), (1,)

    if B <= XLA_BATCH_CUTOFF and not force_pallas:
        # Tiny batch: pallas_call fixed overhead + trailing slice dominate;
        # a fused XLA dot is strictly cheaper on every TPU generation.
        score = (jnp.dot(cls_feature, w_eff[0], precision=jax.lax.Precision.HIGHEST)[:, None]
                 + b_eff)
        return score, cls_feature

    tile_b, grid_b = _pick_tile(B)
    B_pad = tile_b * grid_b
    cls_in = cls_feature if B_pad == B else jnp.pad(cls_feature, ((0, B_pad - B), (0, 0)))

    out = pl.pallas_call(
        _scorer_kernel,
        out_shape=jax.ShapeDtypeStruct((B_pad, OUT_LANES), jnp.float32),
        grid=(grid_b,),
        in_specs=[
            # Dense (tile_b, H) CLS tile per grid step.
            pl.BlockSpec((tile_b, H), lambda i: (i, 0)),
            # Same block every step -> stays resident in VMEM (no re-DMA).
            pl.BlockSpec((1, H), lambda i: (0, 0)),
            # Folded bias as an SMEM scalar.
            pl.BlockSpec(memory_space=pltpu.MemorySpace.SMEM),
        ],
        out_specs=pl.BlockSpec((tile_b, OUT_LANES), lambda i: (i, 0)),
        compiler_params=pltpu.CompilerParams(
            # Batch grid steps are independent -> shard across v7x's 2 TCs;
            # no-op on single-core v5e/v6e.  (If a profile shows one v7x core
            # idle, switch to pltpu.CORE_PARALLEL.)
            dimension_semantics=("parallel",)
        ),
    )(cls_in, w_eff, b_eff)

    score = out[:B, :1]                    # (B, 1); padded rows discarded
    return score, cls_feature


def _reference(last_hidden_state, w1, b1, w2, b2):
    hi = jax.lax.Precision.HIGHEST
    cls = last_hidden_state[:, 0, :]
    h = jnp.dot(cls, w1, precision=hi) + b1       # Linear(768->768)
    # Dropout(p=0.0) -> identity
    s = jnp.dot(h, w2, precision=hi) + b2         # Linear(768->1)
    return s, cls


if __name__ == "__main__":
    key = jax.random.PRNGKey(0)
    k_x, k_w1, k_b1, k_w2, k_b2, k_x2 = jax.random.split(key, 6)

    B, S, H = 2, 8, HIDDEN  # small batch/seq; hidden fixed at 768 by the module

    # Synthetic "last_hidden_state" standing in for the DeBERTa backbone output.
    last_hidden_state = jax.random.normal(k_x, (B, S, H), dtype=jnp.float32)

    # Deterministic parameter init for the scorer head (shapes from __init__).
    scale1 = 1.0 / jnp.sqrt(jnp.float32(H))
    w1 = jax.random.uniform(k_w1, (H, H), jnp.float32, -scale1, scale1)
    b1 = jax.random.uniform(k_b1, (H,), jnp.float32, -scale1, scale1)
    w2 = jax.random.uniform(k_w2, (H, 1), jnp.float32, -scale1, scale1)
    b2 = jax.random.uniform(k_b2, (1,), jnp.float32, -scale1, scale1)

    # Force the Pallas path so the kernel actually runs at this tiny batch.
    score, cls_feature = score_regression_forward(
        last_hidden_state, w1, b1, w2, b2, force_pallas=True)
    jax.block_until_ready((score, cls_feature))

    ref_score, ref_cls = _reference(last_hidden_state, w1, b1, w2, b2)
    assert score.shape == (B, 1) and cls_feature.shape == (B, H)
    assert jnp.allclose(score, ref_score, atol=1e-4, rtol=1e-4)
    assert jnp.allclose(cls_feature, ref_cls)

    # Also exercise the multi-tile + batch-padding path (grid_b = 2).
    B2 = 20
    lhs2 = jax.random.normal(k_x2, (B2, S, H), dtype=jnp.float32)
    score2, cls2 = score_regression_forward(lhs2, w1, b1, w2, b2, force_pallas=True)
    jax.block_until_ready((score2, cls2))
    ref_score2, ref_cls2 = _reference(lhs2, w1, b1, w2, b2)
    assert score2.shape == (B2, 1) and cls2.shape == (B2, H)
    assert jnp.allclose(score2, ref_score2, atol=1e-4, rtol=1e-4)
    assert jnp.allclose(cls2, ref_cls2)

    print("KERNEL_OK")
</pallas_src>

<mosaic_0001>
module attributes {stable_mosaic.version = 11 : i64} {
  func.func @_scorer_kernel(%arg0: i32, %arg1: memref<2x768xf32, #tpu.memory_space<vmem>>, %arg2: memref<1x768xf32, #tpu.memory_space<vmem>>, %arg3: memref<1xf32, #tpu.memory_space<smem>>, %arg4: memref<2x8xf32, #tpu.memory_space<vmem>>) attributes {dimension_semantics = [#tpu.dimension_semantics<parallel>], iteration_bounds = array<i64: 1>, scalar_prefetch = 0 : i64, scratch_operands = 0 : i64, tpu.core_type = #tpu.core_type<tc>, window_params = [{transform_indices = @transform_0, window_bounds = array<i64: 2, 768>}, {pipeline_mode = #tpu.pipeline_mode<synchronous>, transform_indices = @transform_1, window_bounds = array<i64: 1, 768>}, {transform_indices = @transform_2, window_bounds = array<i64: 1>}, {transform_indices = @transform_3, window_bounds = array<i64: 2, 8>}]} {
    %c0 = arith.constant 0 : index
    %c0_0 = arith.constant 0 : index
    %0 = vector.load %arg1[%c0, %c0_0] : memref<2x768xf32, #tpu.memory_space<vmem>>, vector<2x768xf32>
    %c0_1 = arith.constant 0 : index
    %c0_2 = arith.constant 0 : index
    %1 = vector.load %arg2[%c0_1, %c0_2] : memref<1x768xf32, #tpu.memory_space<vmem>>, vector<1x768xf32>
    %2 = vector.broadcast %1 : vector<1x768xf32> to vector<2x768xf32>
    %3 = arith.mulf %0, %2 : vector<2x768xf32>
    %cst = arith.constant dense<0.000000e+00> : vector<2xf32>
    %4 = vector.multi_reduction <add>, %3, %cst [1] : vector<2x768xf32> to vector<2xf32>
    %5 = vector.shape_cast %4 : vector<2xf32> to vector<2x1xf32>
    %c0_3 = arith.constant 0 : index
    %6 = memref.load %arg3[%c0_3] : memref<1xf32, #tpu.memory_space<smem>>
    %7 = vector.broadcast %6 : f32 to vector<2x1xf32>
    %8 = arith.addf %5, %7 : vector<2x1xf32>
    %9 = vector.shape_cast %8 : vector<2x1xf32> to vector<2x1xf32>
    %10 = vector.broadcast %9 : vector<2x1xf32> to vector<2x8xf32>
    %c0_4 = arith.constant 0 : index
    %c0_5 = arith.constant 0 : index
    %11 = vector.load %arg4[%c0_4, %c0_5] : memref<2x8xf32, #tpu.memory_space<vmem>>, vector<2x8xf32>
    tpu.vector_store %arg4[%c0_4, %c0_5], %10 {strides = array<i32>} : memref<2x8xf32, #tpu.memory_space<vmem>>, vector<2x8xf32>,
    return
  }
  func.func @transform_0(%arg0: i32) -> (i32, i32) {
    %c0_i32 = arith.constant 0 : i32
    %c0_i32_0 = arith.constant 0 : i32
    return %arg0, %c0_i32 : i32, i32
  }
  func.func @transform_1(%arg0: i32) -> (i32, i32) {
    %c0_i32 = arith.constant 0 : i32
    %c0_i32_0 = arith.constant 0 : i32
    %c0_i32_1 = arith.constant 0 : i32
    return %c0_i32, %c0_i32_0 : i32, i32
  }
  func.func @transform_2(%arg0: i32) -> i32 {
    %c0_i32 = arith.constant 0 : i32
    %c0_i32_0 = arith.constant 0 : i32
    return %c0_i32 : i32
  }
  func.func @transform_3(%arg0: i32) -> (i32, i32) {
    %c0_i32 = arith.constant 0 : i32
    %c0_i32_0 = arith.constant 0 : i32
    return %arg0, %c0_i32 : i32, i32
  }
}

</mosaic_0001>

<llo_original>
// kernel: tpu_custom_call.1
$region0: #{tpu_custom_call.1}
  #allocation0 [shape = 'u32[]', space=smem, size = 0x4, offset = 0x4, fixed_abs, tag = 'smem constant byte address 0x4 - core index']
  #allocation1 [shape = 'u32[144,128]{1,0:T(1,128)}', space=vmem, size = 0x12000, scoped, tag = 'internal scratch']
  #allocation2 [shape = 'f32[1]{0:T(128)S(6)}', space=smem, size = 0x200, scoped, tag = 'scoped memory for tpu_custom_call.1']
  %s0 = inlined_call_operand.hbm [shape: f32[2,768], index: 0, kind: input, shape index: {}]
  %s1 = inlined_call_operand.vmem [shape: f32[1,768], index: 1, kind: input, shape index: {}]
  %s2 = inlined_call_operand.<no memory space> [shape: f32[1], index: 2, kind: input, shape index: {}]
  %s3 = inlined_call_operand.hbm [shape: f32[2,8], index: 3, kind: output, shape index: {}]
  %s4 = sld [smem:[#allocation0]]
  $region26: #{tpu_custom_call.1} parent=0
    _
  %s6 = ssub.s32 1, %s4
  %s7 = scalar_select 0, %s6, %s4
  %8 = sst [smem:[#allocation2]] %s2
  $region1: #{tpu_custom_call.1} parent=0
    #allocation3 [shape = 'u8[6144]{0}', space=vmem, size = 0x1800, scoped, tag = 'input window, operand 0, single buffered']
    #allocation4 [shape = 's32[1]{0}', space=sflag, size = 0x4, scoped, tag = 'scoped memory for tpu_custom_call.1']
    #allocation5 [shape = 's32[1]{0}', space=sflag, size = 0x4, scoped, tag = 'scoped memory for tpu_custom_call.1']
    #allocation6 [shape = 'u8[1024]{0}', space=vmem, size = 0x400, scoped, tag = 'output window, operand 0, single buffered']
    %9 = vsyncpa [#allocation4], 0
    %10 = vsyncpa [#allocation5], 0
    // Predicated region
    $region2: #{tpu_custom_call.1} parent=1 // pred_check
      _
    $region3: #{tpu_custom_call.1} parent=1 // pred_check_branch
      %12 = sbr.rel (0) target = $region5
    $region4: #{tpu_custom_call.1} parent=1 // pred_region
      %s14 = ssub.s32 192, 192
      %15 = vsyncadd [#allocation4], %s14
      %s17 = sshll.u32 [#allocation3], 4
      %s18 = int_to_ptr.vmem [resolvable:$true] %s17
      %20 = dma.hbm_to_vmem [thread:$0]  %s0, 192, %s18, [#allocation4]
    $region5: #{tpu_custom_call.1} parent=1 // pred_fallthru
      _
    // Predicated region
    $region6: #{tpu_custom_call.1} parent=1 // pred_check
      _
    $region7: #{tpu_custom_call.1} parent=1 // pred_check_branch
      %22 = sbr.rel (0) target = $region9
    $region8: #{tpu_custom_call.1} parent=1 // pred_region
      _
    $region9: #{tpu_custom_call.1} parent=1 // pred_fallthru
      _
    // Predicated region
    $region10: #{tpu_custom_call.1} parent=1 // pred_check
      _
    $region11: #{tpu_custom_call.1} parent=1 // pred_check_branch
      %24 = sbr.rel (0) target = $region13
    $region12: #{tpu_custom_call.1} parent=1 // pred_region
      _
    $region13: #{tpu_custom_call.1} parent=1 // pred_fallthru
      _
    // Predicated region
    $region14: #{tpu_custom_call.1} parent=1 // pred_check
      _
    $region15: #{tpu_custom_call.1} parent=1 // pred_check_branch
      %26 = sbr.rel (0) target = $region17
    $region16: #{tpu_custom_call.1} parent=1 // pred_region
      %27 = dma.done [#allocation4], 192
    $region17: #{tpu_custom_call.1} parent=1 // pred_fallthru
      _
    %v28 = vld [vmem:[#allocation3] sm:$0xff]
    %v29 = vld [vmem:[#allocation3 + $0x8] sm:$0xf]
    %v30 = vld [vmem:[%s1] sm:$0x3f]
    %v32 = vlaneseq
    %v33 = vshrl.u32 %v32, 7
    %v34 = vsub.s32 0, %v33
    %v35 = vrot.slane %v30, %v34
    %v36 = vlaneseq
    %v37 = vshrl.u32 %v36, 7
    %v38 = vsub.s32 1, %v37
    %v39 = vrot.slane %v30, %v38
    %v40 = vlaneseq
    %v41 = vshrl.u32 %v40, 7
    %v42 = vsub.s32 2, %v41
    %v43 = vrot.slane %v30, %v42
    %v44 = vlaneseq
    %v45 = vshrl.u32 %v44, 7
    %v46 = vsub.s32 3, %v45
    %v47 = vrot.slane %v30, %v46
    %v48 = vlaneseq
    %v49 = vshrl.u32 %v48, 7
    %v50 = vsub.s32 4, %v49
    %v51 = vrot.slane %v30, %v50
    %v52 = vlaneseq
    %v53 = vshrl.u32 %v52, 7
    %v54 = vsub.s32 5, %v53
    %v55 = vrot.slane %v30, %v54
    %v56 = vcombine.low %v35, %v39
    %v57 = vcombine.low %v43, %v47
    %v59 = vunpack.c.l.s4 1983009808
    %v60 = vunpack.c.0.s8 %v59
    %v61 = vlaneseq
    %v62 = vshrl.u32 %v61, 7
    %v63 = vsub.s32 %v60, %v62
    %v64 = vrot.slane %v56, %v63
    %v66 = vunpack.c.l.s4 1983009808
    %v67 = vunpack.c.0.s8 %v66
    %v68 = vlaneseq
    %v69 = vshrl.u32 %v68, 7
    %v70 = vsub.s32 %v67, %v69
    %v71 = vrot.slane %v57, %v70
    %v72 = vcombine.low %v64, %v71
    %v73 = vcombine.low %v51, %v55
    %v75 = vunpack.c.l.s4 1983009808
    %v76 = vunpack.c.0.s8 %v75
    %v77 = vlaneseq
    %v78 = vshrl.u32 %v77, 7
    %v79 = vsub.s32 %v76, %v78
    %v80 = vrot.slane %v73, %v79
    %v83 = vmul.f32 %v28, %v72
    %v84 = vmul.f32 %v29, %v80
    %v87 = vcombine.high %v83, %v83
    %v89 = vunpack.c.l.s4 1983009808
    %v90 = vunpack.c.0.s8 %v89
    %v91 = vlaneseq
    %v92 = vshrl.u32 %v91, 7
    %v93 = vsub.s32 %v90, %v92
    %v94 = vrot.slane %v83, %v93
    %v96 = vunpack.c.l.s4 1983009808
    %v97 = vunpack.c.0.s8 %v96
    %v98 = vlaneseq
    %v99 = vshrl.u32 %v98, 7
    %v100 = vsub.s32 %v97, %v99
    %v101 = vrot.slane %v87, %v100
    %v102 = vcombine.high %v94, %v94
    %v103 = vcombine.high %v101, %v101
    %v105 = vunpack.c.l.s4 1983009808
    %v106 = vunpack.c.0.s8 %v105
    %v107 = vlaneseq
    %v108 = vshrl.u32 %v107, 7
    %v109 = vsub.s32 %v106, %v108
    %v110 = vrot.slane %v84, %v109
    %v111 = vcombine.high %v110, %v110
    %vm118 = vcmask 1041408
    %v119 = vsel %vm118, %v94, 0.0
    %v120 = vsel %vm118, %v102, 0.0
    %v121 = vadd.f32 %v119, %v120
    %v122 = vsel %vm118, %v101, 0.0
    %v123 = vadd.f32 %v121, %v122
    %v124 = vsel %vm118, %v103, 0.0
    %v125 = vadd.f32 %v123, %v124
    %v126 = vsel %vm118, %v110, 0.0
    %v127 = vadd.f32 %v125, %v126
    %v128 = vsel %vm118, %v111, 0.0
    %v129 = vadd.f32 %v127, %v128
    %130 = vadd.xlane.f32.xlu0 %v129
    %v131 = vpop.xlane.xlu0 %130
    %s132 = sld [smem:[#allocation2]]
    %v133 = vstv %s132
    %v134 = vadd.f32 %v131, %v133
    %vm135 = vcmask 58368
    %136 = vst.msk [vmem:[#allocation6] sm:$0x3] %vm135, %v134
    // Predicated region
    $region18: #{tpu_custom_call.1} parent=1 // pred_check
      _
    $region19: #{tpu_custom_call.1} parent=1 // pred_check_branch
      %138 = sbr.rel (0) target = $region21
    $region20: #{tpu_custom_call.1} parent=1 // pred_region
      %s140 = ssub.s32 32, 32
      %141 = vsyncadd [#allocation5], %s140
      %s143 = sshll.u32 [#allocation6], 4
      %s144 = int_to_ptr.vmem [resolvable:$true] %s143
      %146 = dma.vmem_to_hbm [thread:$0]  %s144, 32, %s3, [#allocation5]
    $region21: #{tpu_custom_call.1} parent=1 // pred_fallthru
      _
    // Predicated region
    $region22: #{tpu_custom_call.1} parent=1 // pred_check
      _
    $region23: #{tpu_custom_call.1} parent=1 // pred_check_branch
      %148 = sbr.rel (0) target = $region25
    $region24: #{tpu_custom_call.1} parent=1 // pred_region
      %149 = dma.done [#allocation5], 32
    $region25: #{tpu_custom_call.1} parent=1 // pred_fallthru
      _
    %150 = vsyncpa [#allocation4], 1
    %151 = vsyncpa [#allocation5], 1

</llo_original>
